<compile_context>
chip_gen: v7x
topology: tpu7x:2x2x1
jax: 0.10.0
libtpu: 0.0.40
codegen_flags: <defaults>
</compile_context>

<pallas_src>
import functools

import jax
import jax.numpy as jnp
from jax import lax
from jax.experimental import pallas as pl
from jax.experimental.pallas import tpu as pltpu

EPS = 1e-5


# --------------------------------------------------------------------------
# One-time probe: pltpu.roll sign convention.
# We need   shifted[:, p] == a[:, (p + d) % HW].
# With np.roll semantics (out[i] = x[(i - shift) % n]) that is shift = -d.
# --------------------------------------------------------------------------
_ROLL_SIGN = None


def _roll_sign():
    global _ROLL_SIGN
    if _ROLL_SIGN is None:
        def probe(x_ref, o_ref):
            o_ref[...] = pltpu.roll(x_ref[...], 1, axis=1)

        x = jnp.arange(8 * 128, dtype=jnp.float32).reshape(8, 128)
        y = pl.pallas_call(
            probe, out_shape=jax.ShapeDtypeStruct((8, 128), jnp.float32))(x)
        v = float(y[0, 0])
        # np.roll convention -> out[0,0] = x[0,127] = 127 -> use shift = -d.
        # opposite convention -> out[0,0] = x[0,1]   = 1   -> use shift = +d.
        _ROLL_SIGN = 1 if v == 1.0 else -1
    return _ROLL_SIGN


# --------------------------------------------------------------------------
# In-kernel helpers
# --------------------------------------------------------------------------
def _tap_masks(mask_ref):
    """mask_ref: (4, HW) f32 = [row_ok(dy=-1), row_ok(+1), col_ok(dx=-1), col_ok(+1)].

    Returns {(dy,dx): (1,HW) mask or None}; factored masks are combined once and
    reused for every tap of the conv.
    """
    row_ok = {-1: mask_ref[0:1, :], 0: None, 1: mask_ref[1:2, :]}
    col_ok = {-1: mask_ref[2:3, :], 0: None, 1: mask_ref[3:4, :]}
    masks = {}
    for dy in (-1, 0, 1):
        for dx in (-1, 0, 1):
            r, c = row_ok[dy], col_ok[dx]
            if r is None and c is None:
                masks[(dy, dx)] = None
            elif r is None:
                masks[(dy, dx)] = c
            elif c is None:
                masks[(dy, dx)] = r
            else:
                masks[(dy, dx)] = r * c
    return masks


def _conv3x3_accum(a, w_ref, masks, *, W, roll_sign, matmul_dtype):
    """a: (C, HW) f32 for one image; w_ref: (9, Cout, C) in matmul_dtype.

    9 per-tap accumulated MXU matmuls; taps are built with a single XLU lane
    rotate + factored border mask (no padded scratch, no im2col concat).
    Tap/elementwise math stays f32 (v5e-safe); cast to matmul_dtype only for
    the MXU operand (on v6e/v7x one could keep taps in bf16 throughout).
    """
    HW = a.shape[-1]
    acc = None
    t = 0
    for dy in (-1, 0, 1):
        for dx in (-1, 0, 1):
            d = dy * W + dx
            if d == 0:
                tap = a
            else:
                tap = pltpu.roll(a, (roll_sign * d) % HW, axis=1)
            m = masks[(dy, dx)]
            if m is not None:
                tap = tap * m
            part = jnp.dot(w_ref[t], tap.astype(matmul_dtype),
                           preferred_element_type=jnp.float32)
            acc = part if acc is None else acc + part
            t += 1
    return acc


def _image_stats(y):
    """Per-image, per-channel (sum, M2): two-pass within the image (VMEM resident)."""
    hw = y.shape[-1]
    s = jnp.sum(y, axis=1, keepdims=True)            # (C, 1)
    mean = s * (1.0 / hw)
    d = y - mean
    m2 = jnp.sum(d * d, axis=1, keepdims=True)       # (C, 1)
    return s, m2


# --------------------------------------------------------------------------
# Kernels (one grid step == one image)
# --------------------------------------------------------------------------
def _conv_stats_kernel(x_ref, w_ref, mask_ref, y_ref, st_ref,
                       *, W, roll_sign, matmul_dtype):
    masks = _tap_masks(mask_ref)
    a = x_ref[0].astype(jnp.float32)                          # (Cin, HW)
    y = _conv3x3_accum(a, w_ref, masks, W=W, roll_sign=roll_sign,
                       matmul_dtype=matmul_dtype)             # (Cout, HW) f32
    y_ref[0] = y
    s, m2 = _image_stats(y)
    st_ref[0] = jnp.concatenate([s, m2], axis=1)              # (Cout, 2)


def _bn_relu_conv_stats_kernel(yin_ref, sc_ref, sh_ref, w_ref, mask_ref,
                               a_ref, y_ref, st_ref,
                               *, W, roll_sign, matmul_dtype):
    masks = _tap_masks(mask_ref)
    # BN (precomputed affine) + ReLU in f32, then the next conv.
    a = jnp.maximum(yin_ref[0] * sc_ref[...] + sh_ref[...], 0.0)
    a_ref[0] = a.astype(a_ref.dtype)                          # activation out (residual)
    y = _conv3x3_accum(a, w_ref, masks, W=W, roll_sign=roll_sign,
                       matmul_dtype=matmul_dtype)
    y_ref[0] = y
    s, m2 = _image_stats(y)
    st_ref[0] = jnp.concatenate([s, m2], axis=1)


def _bn_add_relu_kernel(y_ref, sc_ref, sh_ref, res_ref, o_ref):
    o_ref[0] = jnp.maximum(
        y_ref[0] * sc_ref[...] + sh_ref[...] + res_ref[0].astype(jnp.float32),
        0.0)


# --------------------------------------------------------------------------
# pallas_call wrappers (grid over N, "parallel")
# --------------------------------------------------------------------------
def _parallel_params():
    return pltpu.CompilerParams(dimension_semantics=("parallel",))


def _conv_stats_call(x3d, w9, masks, *, W, roll_sign, matmul_dtype):
    N, Cin, HW = x3d.shape
    Cout = w9.shape[1]
    kern = functools.partial(_conv_stats_kernel, W=W, roll_sign=roll_sign,
                             matmul_dtype=matmul_dtype)
    flops = 2 * N * Cout * 9 * Cin * HW
    bytes_acc = int(x3d.size * x3d.dtype.itemsize + w9.size * w9.dtype.itemsize
                    + masks.size * 4 + N * Cout * HW * 4 + N * Cout * 2 * 4)
    return pl.pallas_call(
        kern,
        grid=(N,),
        in_specs=[
            pl.BlockSpec((1, Cin, HW), lambda n: (n, 0, 0)),
            pl.BlockSpec((9, Cout, Cin), lambda n: (0, 0, 0)),
            pl.BlockSpec((4, HW), lambda n: (0, 0)),
        ],
        out_specs=(
            pl.BlockSpec((1, Cout, HW), lambda n: (n, 0, 0)),
            pl.BlockSpec((1, Cout, 2), lambda n: (n, 0, 0)),
        ),
        out_shape=(
            jax.ShapeDtypeStruct((N, Cout, HW), jnp.float32),
            jax.ShapeDtypeStruct((N, Cout, 2), jnp.float32),
        ),
        compiler_params=_parallel_params(),
        cost_estimate=pl.CostEstimate(flops=flops, transcendentals=0,
                                      bytes_accessed=bytes_acc),
    )(x3d, w9, masks)


def _bn_relu_conv_call(yin, scale, shift, w9, masks, *, W, roll_sign,
                       matmul_dtype, act_dtype):
    N, Cp, HW = yin.shape
    Cout = w9.shape[1]
    kern = functools.partial(_bn_relu_conv_stats_kernel, W=W, roll_sign=roll_sign,
                             matmul_dtype=matmul_dtype)
    flops = 2 * N * Cout * 9 * Cp * HW
    bytes_acc = int(yin.size * 4 + w9.size * w9.dtype.itemsize + masks.size * 4
                    + N * Cp * HW * jnp.dtype(act_dtype).itemsize
                    + N * Cout * HW * 4 + N * Cout * 2 * 4)
    return pl.pallas_call(
        kern,
        grid=(N,),
        in_specs=[
            pl.BlockSpec((1, Cp, HW), lambda n: (n, 0, 0)),
            pl.BlockSpec((Cp, 1), lambda n: (0, 0)),
            pl.BlockSpec((Cp, 1), lambda n: (0, 0)),
            pl.BlockSpec((9, Cout, Cp), lambda n: (0, 0, 0)),
            pl.BlockSpec((4, HW), lambda n: (0, 0)),
        ],
        out_specs=(
            pl.BlockSpec((1, Cp, HW), lambda n: (n, 0, 0)),
            pl.BlockSpec((1, Cout, HW), lambda n: (n, 0, 0)),
            pl.BlockSpec((1, Cout, 2), lambda n: (n, 0, 0)),
        ),
        out_shape=(
            jax.ShapeDtypeStruct((N, Cp, HW), act_dtype),      # post-BN/ReLU activation
            jax.ShapeDtypeStruct((N, Cout, HW), jnp.float32),  # pre-BN conv output
            jax.ShapeDtypeStruct((N, Cout, 2), jnp.float32),   # per-image (sum, M2)
        ),
        compiler_params=_parallel_params(),
        cost_estimate=pl.CostEstimate(flops=flops, transcendentals=0,
                                      bytes_accessed=bytes_acc),
    )(yin, scale, shift, w9, masks)


def _bn_add_relu_call(y, scale, shift, residual):
    N, C, HW = y.shape
    return pl.pallas_call(
        _bn_add_relu_kernel,
        grid=(N,),
        in_specs=[
            pl.BlockSpec((1, C, HW), lambda n: (n, 0, 0)),
            pl.BlockSpec((C, 1), lambda n: (0, 0)),
            pl.BlockSpec((C, 1), lambda n: (0, 0)),
            pl.BlockSpec((1, C, HW), lambda n: (n, 0, 0)),
        ],
        out_specs=pl.BlockSpec((1, C, HW), lambda n: (n, 0, 0)),
        out_shape=jax.ShapeDtypeStruct((N, C, HW), jnp.float32),
        compiler_params=_parallel_params(),
    )(y, scale, shift, residual)


# --------------------------------------------------------------------------
# Host-side (wrapper) helpers
# --------------------------------------------------------------------------
def _border_masks(H, W):
    """(4, HW) f32 factored border masks, built without integer div/mod."""
    h = lax.broadcasted_iota(jnp.int32, (H, W), 0).reshape(1, H * W)
    w = lax.broadcasted_iota(jnp.int32, (H, W), 1).reshape(1, H * W)
    rows = [
        ((h - 1 >= 0)).astype(jnp.float32),   # row_ok(dy=-1)
        ((h + 1 < H)).astype(jnp.float32),    # row_ok(dy=+1)
        ((w - 1 >= 0)).astype(jnp.float32),   # col_ok(dx=-1)
        ((w + 1 < W)).astype(jnp.float32),    # col_ok(dx=+1)
    ]
    return jnp.concatenate(rows, axis=0)


def _pack_w(w, cin_pad, dtype):
    """OIHW (Cout,Cin,3,3) -> (9, Cout, Cin_pad), tap order (dy, dx)."""
    co, ci = w.shape[0], w.shape[1]
    if cin_pad != ci:
        w = jnp.pad(w, ((0, 0), (0, cin_pad - ci), (0, 0), (0, 0)))
    return jnp.transpose(w, (2, 3, 0, 1)).reshape(9, co, cin_pad).astype(dtype)


def _bn_affine(stats, gamma, beta, hw):
    """Phase 2 of the two-phase BN reduction (tiny, plain JAX).

    stats: (N, C, 2) per-image per-channel [sum, M2]; combined with Chan's
    parallel-variance formula -> numerically stable global mean/var, then folded
    with gamma/beta into a per-channel affine (scale, shift).
    """
    n = stats.shape[0]
    cnt = n * hw
    sums = stats[:, :, 0]                                # (N, C)
    m2s = stats[:, :, 1]                                 # (N, C)
    mean_i = sums / hw
    mean = jnp.sum(sums, axis=0) / cnt                   # (C,)
    m2 = jnp.sum(m2s, axis=0) + hw * jnp.sum((mean_i - mean[None, :]) ** 2, axis=0)
    var = m2 / cnt                                       # biased var (training BN)
    scale = gamma * lax.rsqrt(var + EPS)
    shift = beta - mean * scale
    return (scale.reshape(-1, 1).astype(jnp.float32),
            shift.reshape(-1, 1).astype(jnp.float32))


# --------------------------------------------------------------------------
# Public entry point: NCHW in / NCHW out (free reshapes only)
# --------------------------------------------------------------------------
def unet_res_conv_block(x_nchw, params, *,
                        matmul_dtype=jnp.bfloat16, act_dtype=jnp.bfloat16):
    N, Cin, H, W = x_nchw.shape
    Cout = params["w1"].shape[0]
    HW = H * W
    assert HW % 128 == 0, "H*W must be a multiple of 128 (lane-dense layout)"
    assert Cout % 8 == 0, "Cout must be a multiple of 8 (sublane aligned)"

    roll_sign = _roll_sign()
    cin_p = -(-Cin // 8) * 8                     # pad input channels to sublane count

    x3d = x_nchw.reshape(N, Cin, HW)             # free reshape of NCHW
    if cin_p != Cin:
        x3d = jnp.pad(x3d, ((0, 0), (0, cin_p - Cin), (0, 0)))
    x3d = x3d.astype(act_dtype)

    masks = _border_masks(H, W)
    w1 = _pack_w(params["w1"], cin_p, matmul_dtype)
    w2 = _pack_w(params["w2"], Cout, matmul_dtype)
    w3 = _pack_w(params["w3"], Cout, matmul_dtype)

    # NOTE: conv biases b1/b2/b3 are intentionally NOT used — training-mode
    # BatchNorm subtracts the batch mean, cancelling a per-channel bias exactly.

    # stage 1: conv1 (+ per-image partial stats)
    y1, st1 = _conv_stats_call(x3d, w1, masks, W=W, roll_sign=roll_sign,
                               matmul_dtype=matmul_dtype)
    sc1, sh1 = _bn_affine(st1, params["g1"], params["be1"], HW)

    # stage 2: bn1+relu1 (-> identity), conv2 (+ stats)
    identity, y2, st2 = _bn_relu_conv_call(
        y1, sc1, sh1, w2, masks, W=W, roll_sign=roll_sign,
        matmul_dtype=matmul_dtype, act_dtype=act_dtype)
    sc2, sh2 = _bn_affine(st2, params["g2"], params["be2"], HW)

    # stage 3: bn2+relu2, conv3 (+ stats); the activation output is unused here.
    _, y3, st3 = _bn_relu_conv_call(
        y2, sc2, sh2, w3, masks, W=W, roll_sign=roll_sign,
        matmul_dtype=matmul_dtype, act_dtype=act_dtype)
    sc3, sh3 = _bn_affine(st3, params["g3"], params["be3"], HW)

    # stage 4: bn3 + residual + relu3
    out = _bn_add_relu_call(y3, sc3, sh3, identity)
    return out.reshape(N, Cout, H, W)            # free reshape back to NCHW


# ------------------------- pure-JAX reference ---------------------------------
def reference(x_nchw, params):
    """Matches the PyTorch module (convs with bias, training-mode BN)."""
    def conv(x, w, b):
        y = lax.conv_general_dilated(
            x, w, window_strides=(1, 1), padding=((1, 1), (1, 1)),
            dimension_numbers=("NCHW", "OIHW", "NCHW"),
            precision=lax.Precision.HIGHEST)
        return y + b[None, :, None, None]

    def bn(x, g, be):
        mean = x.mean(axis=(0, 2, 3), keepdims=True)
        var = ((x - mean) ** 2).mean(axis=(0, 2, 3), keepdims=True)
        return (x - mean) / jnp.sqrt(var + EPS) * g[None, :, None, None] \
            + be[None, :, None, None]

    a1 = jax.nn.relu(bn(conv(x_nchw, params["w1"], params["b1"]),
                        params["g1"], params["be1"]))
    a2 = jax.nn.relu(bn(conv(a1, params["w2"], params["b2"]),
                        params["g2"], params["be2"]))
    a3 = bn(conv(a2, params["w3"], params["b3"]), params["g3"], params["be3"])
    return jax.nn.relu(a3 + a1)


if __name__ == "__main__":
    key = jax.random.PRNGKey(0)
    ks = jax.random.split(key, 16)

    N, Cin, Cout, H, W = 2, 4, 8, 16, 16   # in_size=4, out_size=8, padding=1

    x = jax.random.normal(ks[0], (N, Cin, H, W), jnp.float32)
    params = {
        "w1": 0.1 * jax.random.normal(ks[1], (Cout, Cin, 3, 3), jnp.float32),
        "b1": 0.1 * jax.random.normal(ks[2], (Cout,), jnp.float32),
        "g1": 1.0 + 0.1 * jax.random.normal(ks[3], (Cout,), jnp.float32),
        "be1": 0.1 * jax.random.normal(ks[4], (Cout,), jnp.float32),
        "w2": 0.1 * jax.random.normal(ks[5], (Cout, Cout, 3, 3), jnp.float32),
        "b2": 0.1 * jax.random.normal(ks[6], (Cout,), jnp.float32),
        "g2": 1.0 + 0.1 * jax.random.normal(ks[7], (Cout,), jnp.float32),
        "be2": 0.1 * jax.random.normal(ks[8], (Cout,), jnp.float32),
        "w3": 0.1 * jax.random.normal(ks[9], (Cout, Cout, 3, 3), jnp.float32),
        "b3": 0.1 * jax.random.normal(ks[10], (Cout,), jnp.float32),
        "g3": 1.0 + 0.1 * jax.random.normal(ks[11], (Cout,), jnp.float32),
        "be3": 0.1 * jax.random.normal(ks[12], (Cout,), jnp.float32),
    }

    ref = jax.block_until_ready(reference(x, params))

    # Exact-semantics check: f32 MXU operands, f32 inter-kernel activations.
    out_f32 = jax.block_until_ready(
        unet_res_conv_block(x, params, matmul_dtype=jnp.float32,
                            act_dtype=jnp.float32))
    err_f32 = float(jnp.max(jnp.abs(out_f32 - ref)))

    # Production-style path (v6e/v7x): bf16 MXU operands, bf16 inter-kernel
    # activations, f32 accumulation / BN / ReLU.  Looser bound only reflects
    # bf16 operand + storage rounding across three conv+BN layers.
    out_bf16 = jax.block_until_ready(unet_res_conv_block(x, params))
    err_bf16 = float(jnp.max(jnp.abs(out_bf16 - ref)))

    assert out_f32.shape == out_bf16.shape == ref.shape == (N, Cout, H, W)
    if err_f32 < 2e-3 and err_bf16 < 1e-1:
        print("KERNEL_OK")
    else:
        print(f"MISMATCH f32_err={err_f32} bf16_err={err_bf16}")
</pallas_src>

<mosaic_0001>
module attributes {stable_mosaic.version = 11 : i64} {
  func.func @probe(%arg0: memref<8x128xf32, #tpu.memory_space<vmem>>, %arg1: memref<8x128xf32, #tpu.memory_space<vmem>>) attributes {dimension_semantics = [], scalar_prefetch = 0 : i64, scratch_operands = 0 : i64, tpu.core_type = #tpu.core_type<tc>} {
    %c0 = arith.constant 0 : index
    %c0_0 = arith.constant 0 : index
    %0 = vector.load %arg0[%c0, %c0_0] : memref<8x128xf32, #tpu.memory_space<vmem>>, vector<8x128xf32>
    %c1_i32 = arith.constant 1 : i32
    %1 = tpu.dynamic_rotate %0 by %c1_i32 dim 1 : vector<8x128xf32>, i32 -> vector<8x128xf32>
    %c0_1 = arith.constant 0 : index
    %c0_2 = arith.constant 0 : index
    %2 = vector.load %arg1[%c0_1, %c0_2] : memref<8x128xf32, #tpu.memory_space<vmem>>, vector<8x128xf32>
    tpu.vector_store %arg1[%c0_1, %c0_2], %1 {strides = array<i32>} : memref<8x128xf32, #tpu.memory_space<vmem>>, vector<8x128xf32>,
    return
  }
}

</mosaic_0001>

<llo_original>
// kernel: tpu_custom_call.1
$region0: #{tpu_custom_call.1}
  #allocation0 [shape = 'u32[]', space=smem, size = 0x4, offset = 0x4, fixed_abs, tag = 'smem constant byte address 0x4 - core index']
  #allocation1 [shape = 'u32[144,128]{1,0:T(1,128)}', space=vmem, size = 0x12000, scoped, tag = 'internal scratch']
  %s0 = inlined_call_operand.hbm [shape: f32[8,128], index: 0, kind: input, shape index: {}]
  %s1 = inlined_call_operand.hbm [shape: f32[8,128], index: 1, kind: output, shape index: {}]
  %s2 = sld [smem:[#allocation0]]
  $region18: #{tpu_custom_call.1} parent=0
    _
  %s4 = ssub.s32 1, %s2
  %s5 = scalar_select 0, %s4, %s2
  $region1: #{tpu_custom_call.1} parent=0
    #allocation2 [shape = 'u8[4096]{0}', space=vmem, size = 0x1000, scoped, tag = 'input window, operand 0, single buffered']
    #allocation3 [shape = 's32[1]{0}', space=sflag, size = 0x4, scoped, tag = 'scoped memory for tpu_custom_call.1']
    #allocation4 [shape = 's32[1]{0}', space=sflag, size = 0x4, scoped, tag = 'scoped memory for tpu_custom_call.1']
    #allocation5 [shape = 'u8[4096]{0}', space=vmem, size = 0x1000, scoped, tag = 'output window, operand 0, single buffered']
    %6 = vsyncpa [#allocation3], 0
    %7 = vsyncpa [#allocation4], 0
    // Predicated region
    $region2: #{tpu_custom_call.1} parent=1 // pred_check
      _
    $region3: #{tpu_custom_call.1} parent=1 // pred_check_branch
      %9 = sbr.rel (0) target = $region5
    $region4: #{tpu_custom_call.1} parent=1 // pred_region
      %s11 = ssub.s32 128, 128
      %12 = vsyncadd [#allocation3], %s11
      %s14 = sshll.u32 [#allocation2], 4
      %s15 = int_to_ptr.vmem [resolvable:$true] %s14
      %17 = dma.hbm_to_vmem [thread:$0]  %s0, 128, %s15, [#allocation3]
    $region5: #{tpu_custom_call.1} parent=1 // pred_fallthru
      _
    // Predicated region
    $region6: #{tpu_custom_call.1} parent=1 // pred_check
      _
    $region7: #{tpu_custom_call.1} parent=1 // pred_check_branch
      %19 = sbr.rel (0) target = $region9
    $region8: #{tpu_custom_call.1} parent=1 // pred_region
      %20 = dma.done [#allocation3], 128
    $region9: #{tpu_custom_call.1} parent=1 // pred_fallthru
      _
    %v21 = vld [vmem:[#allocation2] sm:$0xff]
    %22 = vrot.lane.b32.xlu0 %v21, 1
    %v23 = vpop.permute.xlu0 %22
    %24 = vst [vmem:[#allocation5] sm:$0xff] %v23
    // Predicated region
    $region10: #{tpu_custom_call.1} parent=1 // pred_check
      _
    $region11: #{tpu_custom_call.1} parent=1 // pred_check_branch
      %26 = sbr.rel (0) target = $region13
    $region12: #{tpu_custom_call.1} parent=1 // pred_region
      %s28 = ssub.s32 128, 128
      %29 = vsyncadd [#allocation4], %s28
      %s31 = sshll.u32 [#allocation5], 4
      %s32 = int_to_ptr.vmem [resolvable:$true] %s31
      %34 = dma.vmem_to_hbm [thread:$0]  %s32, 128, %s1, [#allocation4]
    $region13: #{tpu_custom_call.1} parent=1 // pred_fallthru
      _
    // Predicated region
    $region14: #{tpu_custom_call.1} parent=1 // pred_check
      _
    $region15: #{tpu_custom_call.1} parent=1 // pred_check_branch
      %36 = sbr.rel (0) target = $region17
    $region16: #{tpu_custom_call.1} parent=1 // pred_region
      %37 = dma.done [#allocation4], 128
    $region17: #{tpu_custom_call.1} parent=1 // pred_fallthru
      _
    %38 = vsyncpa [#allocation3], 1
    %39 = vsyncpa [#allocation4], 1

</llo_original>
